<compile_context>
chip_gen: v6e
topology: v6e:2x2x1
jax: 0.10.0
libtpu: 0.0.40
codegen_flags: <defaults>
</compile_context>

<pallas_src>
import functools

import jax
import jax.numpy as jnp
from jax.experimental import pallas as pl
from jax.experimental.pallas import tpu as pltpu


def _round_up(x, m):
    return ((x + m - 1) // m) * m


def _gated_conv_stats_kernel(p_ref, w_ref, b_ref, y_ref, sum_ref, sq_ref,
                             *, co_pad, s_valid, tile_s, s_padded,
                             exact_sigmoid):
    """Fused feature+gate conv matmul, gating, and per-image BN partial sums.

    p_ref   : (1, Kdim, tile_s)    patch tile (spatial in lanes)
    w_ref   : (2*co_pad, Kdim)     resident fused weights (feature || gate)
    b_ref   : (2*co_pad, 1)        resident fused bias column
    y_ref   : (1, co_pad, tile_s)  gated, pre-BN output tile (bf16/f32)
    sum_ref : (1, co_pad, 1)       per-image sum accumulator   (output block)
    sq_ref  : (1, co_pad, 1)       per-image sumsq accumulator (output block)
    """
    s = pl.program_id(1)

    @pl.when(s == 0)
    def _():
        sum_ref[...] = jnp.zeros_like(sum_ref)
        sq_ref[...] = jnp.zeros_like(sq_ref)

    # One fused MXU matmul for both convolutions: rows [0:co_pad] = feature,
    # rows [co_pad:2*co_pad] = gating.  f32 accumulation + f32 bias add.
    acc = jnp.dot(w_ref[...], p_ref[0],
                  preferred_element_type=jnp.float32) + b_ref[...]
    feat = acc[:co_pad, :]
    gate = acc[co_pad:, :]
    feat = jnp.where(feat >= 0, feat, 0.2 * feat)          # LeakyReLU(0.2)
    gate = jnp.maximum(gate, -60.0)                        # exp overflow guard
    denom = 1.0 + jnp.exp(-gate)                           # EUP exp
    if exact_sigmoid:
        gate = 1.0 / denom                                 # exact (f32 path)
    else:
        gate = pl.reciprocal(denom, approx=True)           # EUP recip (bf16)
    y = feat * gate
    y_ref[0] = y.astype(y_ref.dtype)

    def _accumulate(yv):
        sum_ref[0] += jnp.sum(yv, axis=-1, keepdims=True)
        sq_ref[0] += jnp.sum(yv * yv, axis=-1, keepdims=True)

    if not s_padded:
        # Every spatial tile is full: no masking VPU work at all.
        _accumulate(y)
    else:
        # Only the (statically known) ragged last tile pays for the mask.
        is_last = s == pl.num_programs(1) - 1

        @pl.when(jnp.logical_not(is_last))
        def _():
            _accumulate(y)

        @pl.when(is_last)
        def _():
            col = s * tile_s + jax.lax.broadcasted_iota(
                jnp.int32, (1, tile_s), 1)
            _accumulate(jnp.where(col < s_valid, y, 0.0))


def _bn_apply_kernel(y_ref, scale_ref, shift_ref, o_ref):
    y = y_ref[...].astype(jnp.float32)
    o_ref[...] = (y * scale_ref[...] + shift_ref[...]).astype(o_ref.dtype)


def gated_up_conv2d(x, w_feat, b_feat, w_gate, b_gate, gamma, beta,
                    *, scale_factor=2, stride=1, padding=1,
                    tile_s=2048, mxu_dtype=jnp.bfloat16, vmem_limit_mb=48):
    """x: [N, C_in, H, W] (NCHW). Returns [N, C_out, H_out, W_out].

    tile_s: spatial (lane) tile, multiple of 128.  Raise it (and
    vmem_limit_mb up to ~96) on v5e/v6e (128 MiB VMEM); keep the VMEM budget
    <= ~48 MiB on v7x (64 MiB VMEM per TensorCore).
    """
    N, Cin, H, W = x.shape
    Cout, _, K, _ = w_feat.shape
    assert tile_s % 128 == 0

    # ---- host glue: nearest-neighbour 2x upsample + zero pad + im2col ------
    # TODO(synk): fuse into pass 1 (pl.ANY input + make_async_copy of K*K
    # shifted windows, K*K skinny matmuls) to kill the im2col HBM blow-up.
    xq = x.astype(mxu_dtype)                          # cast early: less HBM
    xu = jnp.repeat(jnp.repeat(xq, scale_factor, axis=2), scale_factor, axis=3)
    Hu, Wu = H * scale_factor, W * scale_factor
    xp = jnp.pad(xu, ((0, 0), (0, 0), (padding, padding), (padding, padding)))
    Ho = (Hu + 2 * padding - K) // stride + 1
    Wo = (Wu + 2 * padding - K) // stride + 1

    cols = []
    for i in range(K):
        for j in range(K):
            cols.append(xp[:, :, i:i + stride * Ho:stride,
                           j:j + stride * Wo:stride])
    Kdim = Cin * K * K
    S = Ho * Wo
    # [N, Cin, K*K, Ho, Wo] -> [N, Kdim, S]: contraction rows ordered
    # (c_in, kh, kw) to match the PyTorch OIHW weight flatten, spatial
    # (row-major) in the lane dim -> lane-dense patch loads.
    patches = jnp.stack(cols, axis=2).reshape(N, Kdim, S)

    ts = min(tile_s, _round_up(S, 128))
    n_s = pl.cdiv(S, ts)
    Sp = n_s * ts
    if Sp != S:
        patches = jnp.pad(patches, ((0, 0), (0, 0), (0, Sp - S)))

    # Only sublane-pad the channel dim (8), not a 128-lane pad.
    Co = _round_up(Cout, 8)
    wcat = jnp.zeros((2 * Co, Kdim), jnp.float32)
    wcat = wcat.at[:Cout].set(w_feat.reshape(Cout, Kdim))
    wcat = wcat.at[Co:Co + Cout].set(w_gate.reshape(Cout, Kdim))
    wcat = wcat.astype(mxu_dtype)
    bcat = jnp.zeros((2 * Co, 1), jnp.float32)
    bcat = bcat.at[:Cout, 0].set(b_feat).at[Co:Co + Cout, 0].set(b_gate)

    y_dtype = mxu_dtype          # bf16 intermediate halves pass-1 writeback
                                 # and all of pass-2's streaming traffic.
    exact_sigmoid = jnp.dtype(mxu_dtype) == jnp.dtype(jnp.float32)

    kern1 = functools.partial(
        _gated_conv_stats_kernel, co_pad=Co, s_valid=S, tile_s=ts,
        s_padded=(Sp != S), exact_sigmoid=exact_sigmoid)

    itemsize = jnp.dtype(mxu_dtype).itemsize
    cost1 = pl.CostEstimate(
        flops=2 * N * Sp * Kdim * 2 * Co,
        transcendentals=N * Sp * Co,
        bytes_accessed=(N * Kdim * Sp + 2 * Co * Kdim) * itemsize
                       + N * Co * Sp * jnp.dtype(y_dtype).itemsize)

    vmem_limit = int(vmem_limit_mb) * 1024 * 1024

    # ---- pass 1: fused conv matmul + gating + per-image BN partial sums ----
    y_pre, psum, psq = pl.pallas_call(
        kern1,
        out_shape=(jax.ShapeDtypeStruct((N, Co, Sp), y_dtype),
                   jax.ShapeDtypeStruct((N, Co, 1), jnp.float32),
                   jax.ShapeDtypeStruct((N, Co, 1), jnp.float32)),
        grid=(N, n_s),
        in_specs=[
            pl.BlockSpec((1, Kdim, ts), lambda n, s: (n, 0, s)),   # patch tile
            pl.BlockSpec((2 * Co, Kdim), lambda n, s: (0, 0)),     # resident W
            pl.BlockSpec((2 * Co, 1), lambda n, s: (0, 0)),        # resident b
        ],
        out_specs=(
            pl.BlockSpec((1, Co, ts), lambda n, s: (n, 0, s)),     # pre-BN y
            pl.BlockSpec((1, Co, 1), lambda n, s: (n, 0, 0)),      # sum acc
            pl.BlockSpec((1, Co, 1), lambda n, s: (n, 0, 0)),      # sumsq acc
        ),
        compiler_params=pltpu.CompilerParams(
            # Batch axis "parallel" -> megacore split of the MXU pass on v7x
            # (2 TCs); spatial axis "arbitrary" because the BN partial sums
            # accumulate across it.  (For N==1 the spatial axis could be
            # further chunked into a parallel outer axis with per-chunk
            # partials.)
            dimension_semantics=("parallel", "arbitrary"),
            vmem_limit_bytes=vmem_limit),
        cost_estimate=cost1,
    )(patches, wcat, bcat)

    # ---- tiny cross-image combine (a few Co-length vectors) in plain XLA ---
    # Training-mode BatchNorm: biased variance, eps=1e-5.  (Running-stat
    # updates are a training side effect and do not affect the forward output.)
    m_total = jnp.float32(N * S)
    mean = jnp.sum(psum[:, :, 0], axis=0) / m_total
    var = jnp.maximum(jnp.sum(psq[:, :, 0], axis=0) / m_total - mean * mean,
                      0.0)
    gamma_p = jnp.zeros((Co,), jnp.float32).at[:Cout].set(gamma)
    beta_p = jnp.zeros((Co,), jnp.float32).at[:Cout].set(beta)
    scale = gamma_p * jax.lax.rsqrt(var + 1e-5)
    shift = beta_p - mean * scale

    # ---- pass 2: streaming BN apply, written in place of y_pre -------------
    out = pl.pallas_call(
        _bn_apply_kernel,
        out_shape=jax.ShapeDtypeStruct((N, Co, Sp), y_dtype),
        grid=(N, n_s),
        in_specs=[pl.BlockSpec((1, Co, ts), lambda n, s: (n, 0, s)),
                  pl.BlockSpec((Co, 1), lambda n, s: (0, 0)),
                  pl.BlockSpec((Co, 1), lambda n, s: (0, 0))],
        out_specs=pl.BlockSpec((1, Co, ts), lambda n, s: (n, 0, s)),
        input_output_aliases={0: 0},          # reuse the y_pre HBM buffer
        compiler_params=pltpu.CompilerParams(
            dimension_semantics=("parallel", "parallel"),
            vmem_limit_bytes=vmem_limit),
    )(y_pre, scale[:, None], shift[:, None])

    # Output is already channel-major per image ([N, C, Ho*Wo]); when no
    # padding was needed the reshape below is metadata-only (no trailing HBM
    # round-trip / transpose).
    if Co != Cout or Sp != S:
        out = out[:, :Cout, :S]
    return out.reshape(N, Cout, Ho, Wo)


def ref_forward(x, w_feat, b_feat, w_gate, b_gate, gamma, beta,
                *, scale_factor=2, stride=1, padding=1):
    """Pure-JAX reference mirroring the PyTorch module (training-mode BN)."""
    xu = jnp.repeat(jnp.repeat(x, scale_factor, axis=2), scale_factor, axis=3)
    dn = jax.lax.conv_dimension_numbers(xu.shape, w_feat.shape,
                                        ('NCHW', 'OIHW', 'NCHW'))

    def conv(w):
        return jax.lax.conv_general_dilated(
            xu, w, window_strides=(stride, stride),
            padding=[(padding, padding), (padding, padding)],
            dimension_numbers=dn, precision=jax.lax.Precision.HIGHEST)

    feat = conv(w_feat) + b_feat[None, :, None, None]
    gate = conv(w_gate) + b_gate[None, :, None, None]
    y = jnp.where(feat >= 0, feat, 0.2 * feat) * jax.nn.sigmoid(gate)
    mean = jnp.mean(y, axis=(0, 2, 3), keepdims=True)
    var = jnp.mean((y - mean) ** 2, axis=(0, 2, 3), keepdims=True)
    y = (y - mean) / jnp.sqrt(var + 1e-5)
    return y * gamma[None, :, None, None] + beta[None, :, None, None]


if __name__ == "__main__":
    key = jax.random.PRNGKey(0)

    def make_params(k, cin, cout, ksz):
        kwf, kbf, kwg, kbg, kg, kb = jax.random.split(k, 6)
        fan_in = cin * ksz * ksz
        bound = 1.0 / (fan_in ** 0.5)
        w_f = jax.random.uniform(kwf, (cout, cin, ksz, ksz), jnp.float32,
                                 -bound, bound)
        b_f = jax.random.uniform(kbf, (cout,), jnp.float32, -bound, bound)
        w_g = jax.random.uniform(kwg, (cout, cin, ksz, ksz), jnp.float32,
                                 -bound, bound)
        b_g = jax.random.uniform(kbg, (cout,), jnp.float32, -bound, bound)
        g = 1.0 + 0.1 * jax.random.normal(kg, (cout,), jnp.float32)
        b = 0.1 * jax.random.normal(kb, (cout,), jnp.float32)
        return w_f, b_f, w_g, b_g, g, b

    # GatedUpConv2d(in_channels=4, out_channels=8, kernel_size=3, stride=1,
    #               padding=1, scale_factor=2)
    kx, kp, key = jax.random.split(key, 3)
    x = jax.random.normal(kx, (2, 4, 8, 8), jnp.float32)
    params = make_params(kp, 4, 8, 3)
    ref = ref_forward(x, *params)

    # f32 MXU path, tile_s=128 -> two spatial tiles per image so the
    # cross-tile BN accumulation is exercised; exact sigmoid, tight tol.
    out32 = gated_up_conv2d(x, *params, tile_s=128, mxu_dtype=jnp.float32)
    out32 = jax.block_until_ready(out32)
    assert out32.shape == (2, 8, 16, 16), out32.shape
    err32 = float(jnp.max(jnp.abs(out32 - ref)))
    assert err32 < 5e-3, err32

    # Default perf config: bf16 matmul inputs, bf16 intermediate & output.
    out16 = gated_up_conv2d(x, *params)
    out16 = jax.block_until_ready(out16)
    err16 = float(jnp.max(jnp.abs(out16.astype(jnp.float32) - ref)))
    assert err16 < 1e-1, err16

    # Ragged config: S=196 padded to 256, Cout=5 padded to 8 -> exercises the
    # masked-stats path and the channel/spatial slice path.
    kx2, kp2, key = jax.random.split(key, 3)
    x2 = jax.random.normal(kx2, (1, 3, 7, 7), jnp.float32)
    params2 = make_params(kp2, 3, 5, 3)
    ref2 = ref_forward(x2, *params2)
    out2 = gated_up_conv2d(x2, *params2, mxu_dtype=jnp.float32)
    out2 = jax.block_until_ready(out2)
    assert out2.shape == (1, 5, 14, 14), out2.shape
    err2 = float(jnp.max(jnp.abs(out2 - ref2)))
    assert err2 < 5e-3, err2

    print("KERNEL_OK")
</pallas_src>

<mosaic_0001>
module attributes {stable_mosaic.version = 11 : i64} {
  func.func @_gated_conv_stats_kernel(%arg0: i32, %arg1: i32, %arg2: memref<1x36x128xf32, #tpu.memory_space<vmem>>, %arg3: memref<16x36xf32, #tpu.memory_space<vmem>>, %arg4: memref<16x1xf32, #tpu.memory_space<vmem>>, %arg5: memref<1x8x128xf32, #tpu.memory_space<vmem>>, %arg6: memref<1x8x1xf32, #tpu.memory_space<vmem>>, %arg7: memref<1x8x1xf32, #tpu.memory_space<vmem>>) attributes {dimension_semantics = [#tpu.dimension_semantics<parallel>, #tpu.dimension_semantics<arbitrary>], iteration_bounds = array<i64: 2, 2>, scalar_prefetch = 0 : i64, scratch_operands = 0 : i64, tpu.core_type = #tpu.core_type<tc>, window_params = [{transform_indices = @transform_0, window_bounds = array<i64: 1, 36, 128>}, {pipeline_mode = #tpu.pipeline_mode<synchronous>, transform_indices = @transform_1, window_bounds = array<i64: 16, 36>}, {pipeline_mode = #tpu.pipeline_mode<synchronous>, transform_indices = @transform_2, window_bounds = array<i64: 16, 1>}, {transform_indices = @transform_3, window_bounds = array<i64: 1, 8, 128>}, {transform_indices = @transform_4, window_bounds = array<i64: 1, 8, 1>}, {transform_indices = @transform_5, window_bounds = array<i64: 1, 8, 1>}]} {
    %c0_i32 = arith.constant 0 : i32
    %0 = arith.cmpi eq, %arg1, %c0_i32 : i32
    %1 = arith.extui %0 : i1 to i32
    %c0_i32_0 = arith.constant 0 : i32
    %2 = arith.cmpi ne, %1, %c0_i32_0 : i32
    scf.if %2 {
      %cst_30 = arith.constant 0.000000e+00 : f32
      %47 = vector.broadcast %cst_30 : f32 to vector<1x8x1xf32>
      %c0_31 = arith.constant 0 : index
      %c0_32 = arith.constant 0 : index
      %c0_33 = arith.constant 0 : index
      %48 = vector.load %arg6[%c0_31, %c0_32, %c0_33] : memref<1x8x1xf32, #tpu.memory_space<vmem>>, vector<1x8x1xf32>
      tpu.vector_store %arg6[%c0_31, %c0_32, %c0_33], %47 {strides = array<i32>} : memref<1x8x1xf32, #tpu.memory_space<vmem>>, vector<1x8x1xf32>,
      %cst_34 = arith.constant 0.000000e+00 : f32
      %49 = vector.broadcast %cst_34 : f32 to vector<1x8x1xf32>
      %c0_35 = arith.constant 0 : index
      %c0_36 = arith.constant 0 : index
      %c0_37 = arith.constant 0 : index
      %50 = vector.load %arg7[%c0_35, %c0_36, %c0_37] : memref<1x8x1xf32, #tpu.memory_space<vmem>>, vector<1x8x1xf32>
      tpu.vector_store %arg7[%c0_35, %c0_36, %c0_37], %49 {strides = array<i32>} : memref<1x8x1xf32, #tpu.memory_space<vmem>>, vector<1x8x1xf32>,
    } else {
    }
    %c0 = arith.constant 0 : index
    %c0_1 = arith.constant 0 : index
    %3 = vector.load %arg3[%c0, %c0_1] : memref<16x36xf32, #tpu.memory_space<vmem>>, vector<16x36xf32>
    %c0_2 = arith.constant 0 : index
    %c0_3 = arith.constant 0 : index
    %c0_4 = arith.constant 0 : index
    %4 = vector.load %arg2[%c0_2, %c0_3, %c0_4] : memref<1x36x128xf32, #tpu.memory_space<vmem>>, vector<1x36x128xf32>
    %5 = vector.shape_cast %4 : vector<1x36x128xf32> to vector<36x128xf32>
    %cst = arith.constant dense<0.000000e+00> : vector<16x128xf32>
    %6 = tpu.matmul %3, %5, %cst {dimension_numbers = #tpu.dot_dimension_numbers<[1], [0], [0], [1], [0, 0, 1, 1], [], []>} : vector<16x36xf32>, vector<36x128xf32>, vector<16x128xf32> -> vector<16x128xf32>
    %c0_5 = arith.constant 0 : index
    %c0_6 = arith.constant 0 : index
    %7 = vector.load %arg4[%c0_5, %c0_6] : memref<16x1xf32, #tpu.memory_space<vmem>>, vector<16x1xf32>
    %8 = vector.broadcast %7 : vector<16x1xf32> to vector<16x128xf32>
    %9 = arith.addf %6, %8 : vector<16x128xf32>
    %10 = vector.extract_strided_slice %9 {offsets = [0, 0], sizes = [8, 128], strides = [1, 1]} : vector<16x128xf32> to vector<8x128xf32>
    %11 = vector.extract_strided_slice %9 {offsets = [8, 0], sizes = [8, 128], strides = [1, 1]} : vector<16x128xf32> to vector<8x128xf32>
    %cst_7 = arith.constant 0.000000e+00 : f32
    %12 = vector.broadcast %cst_7 : f32 to vector<8x128xf32>
    %13 = arith.cmpf oge, %10, %12 : vector<8x128xf32>
    %cst_8 = arith.constant 2.000000e-01 : f32
    %14 = vector.broadcast %cst_8 : f32 to vector<8x128xf32>
    %15 = arith.mulf %14, %10 : vector<8x128xf32>
    %16 = arith.select %13, %10, %15 : vector<8x128xi1>, vector<8x128xf32>
    %cst_9 = arith.constant -6.000000e+01 : f32
    %17 = vector.broadcast %cst_9 : f32 to vector<8x128xf32>
    %18 = arith.maximumf %11, %17 : vector<8x128xf32>
    %cst_10 = arith.constant 0.000000e+00 : f32
    %19 = vector.broadcast %cst_10 : f32 to vector<8x128xf32>
    %20 = arith.subf %19, %18 : vector<8x128xf32>
    %21 = math.exp %20 : vector<8x128xf32>
    %cst_11 = arith.constant 1.000000e+00 : f32
    %22 = vector.broadcast %cst_11 : f32 to vector<8x128xf32>
    %23 = arith.addf %22, %21 : vector<8x128xf32>
    %cst_12 = arith.constant 1.000000e+00 : f32
    %24 = vector.broadcast %cst_12 : f32 to vector<8x128xf32>
    %25 = arith.divf %24, %23 : vector<8x128xf32>
    %26 = arith.mulf %16, %25 : vector<8x128xf32>
    %c0_13 = arith.constant 0 : index
    %c0_14 = arith.constant 0 : index
    %c0_15 = arith.constant 0 : index
    %27 = vector.load %arg5[%c0_13, %c0_14, %c0_15] : memref<1x8x128xf32, #tpu.memory_space<vmem>>, vector<1x8x128xf32>
    %28 = vector.shape_cast %27 : vector<1x8x128xf32> to vector<8x128xf32>
    %29 = vector.shape_cast %26 : vector<8x128xf32> to vector<1x8x128xf32>
    tpu.vector_store %arg5[%c0_13, %c0_14, %c0_15], %29 {strides = array<i32>} : memref<1x8x128xf32, #tpu.memory_space<vmem>>, vector<1x8x128xf32>,
    %c0_16 = arith.constant 0 : index
    %c0_17 = arith.constant 0 : index
    %c0_18 = arith.constant 0 : index
    %30 = vector.load %arg6[%c0_16, %c0_17, %c0_18] : memref<1x8x1xf32, #tpu.memory_space<vmem>>, vector<1x8x1xf32>
    %31 = vector.shape_cast %30 : vector<1x8x1xf32> to vector<8x1xf32>
    %cst_19 = arith.constant dense<0.000000e+00> : vector<8xf32>
    %32 = vector.multi_reduction <add>, %26, %cst_19 [1] : vector<8x128xf32> to vector<8xf32>
    %33 = vector.shape_cast %32 : vector<8xf32> to vector<8x1xf32>
    %34 = arith.addf %31, %33 : vector<8x1xf32>
    %c0_20 = arith.constant 0 : index
    %c0_21 = arith.constant 0 : index
    %c0_22 = arith.constant 0 : index
    %35 = vector.load %arg6[%c0_20, %c0_21, %c0_22] : memref<1x8x1xf32, #tpu.memory_space<vmem>>, vector<1x8x1xf32>
    %36 = vector.shape_cast %35 : vector<1x8x1xf32> to vector<8x1xf32>
    %37 = vector.shape_cast %34 : vector<8x1xf32> to vector<1x8x1xf32>
    tpu.vector_store %arg6[%c0_20, %c0_21, %c0_22], %37 {strides = array<i32>} : memref<1x8x1xf32, #tpu.memory_space<vmem>>, vector<1x8x1xf32>,
    %c0_23 = arith.constant 0 : index
    %c0_24 = arith.constant 0 : index
    %c0_25 = arith.constant 0 : index
    %38 = vector.load %arg7[%c0_23, %c0_24, %c0_25] : memref<1x8x1xf32, #tpu.memory_space<vmem>>, vector<1x8x1xf32>
    %39 = vector.shape_cast %38 : vector<1x8x1xf32> to vector<8x1xf32>
    %40 = arith.mulf %26, %26 : vector<8x128xf32>
    %cst_26 = arith.constant dense<0.000000e+00> : vector<8xf32>
    %41 = vector.multi_reduction <add>, %40, %cst_26 [1] : vector<8x128xf32> to vector<8xf32>
    %42 = vector.shape_cast %41 : vector<8xf32> to vector<8x1xf32>
    %43 = arith.addf %39, %42 : vector<8x1xf32>
    %c0_27 = arith.constant 0 : index
    %c0_28 = arith.constant 0 : index
    %c0_29 = arith.constant 0 : index
    %44 = vector.load %arg7[%c0_27, %c0_28, %c0_29] : memref<1x8x1xf32, #tpu.memory_space<vmem>>, vector<1x8x1xf32>
    %45 = vector.shape_cast %44 : vector<1x8x1xf32> to vector<8x1xf32>
    %46 = vector.shape_cast %43 : vector<8x1xf32> to vector<1x8x1xf32>
    tpu.vector_store %arg7[%c0_27, %c0_28, %c0_29], %46 {strides = array<i32>} : memref<1x8x1xf32, #tpu.memory_space<vmem>>, vector<1x8x1xf32>,
    return
  }
  func.func @transform_0(%arg0: i32, %arg1: i32) -> (i32, i32, i32) {
    %c0_i32 = arith.constant 0 : i32
    %c0_i32_0 = arith.constant 0 : i32
    return %arg0, %c0_i32, %arg1 : i32, i32, i32
  }
  func.func @transform_1(%arg0: i32, %arg1: i32) -> (i32, i32) {
    %c0_i32 = arith.constant 0 : i32
    %c0_i32_0 = arith.constant 0 : i32
    %c0_i32_1 = arith.constant 0 : i32
    return %c0_i32, %c0_i32_0 : i32, i32
  }
  func.func @transform_2(%arg0: i32, %arg1: i32) -> (i32, i32) {
    %c0_i32 = arith.constant 0 : i32
    %c0_i32_0 = arith.constant 0 : i32
    %c0_i32_1 = arith.constant 0 : i32
    return %c0_i32, %c0_i32_0 : i32, i32
  }
  func.func @transform_3(%arg0: i32, %arg1: i32) -> (i32, i32, i32) {
    %c0_i32 = arith.constant 0 : i32
    %c0_i32_0 = arith.constant 0 : i32
    return %arg0, %c0_i32, %arg1 : i32, i32, i32
  }
  func.func @transform_4(%arg0: i32, %arg1: i32) -> (i32, i32, i32) {
    %c0_i32 = arith.constant 0 : i32
    %c0_i32_0 = arith.constant 0 : i32
    %c0_i32_1 = arith.constant 0 : i32
    return %arg0, %c0_i32, %c0_i32_0 : i32, i32, i32
  }
  func.func @transform_5(%arg0: i32, %arg1: i32) -> (i32, i32, i32) {
    %c0_i32 = arith.constant 0 : i32
    %c0_i32_0 = arith.constant 0 : i32
    %c0_i32_1 = arith.constant 0 : i32
    return %arg0, %c0_i32, %c0_i32_0 : i32, i32, i32
  }
}

</mosaic_0001>

<llo_original>
// kernel: tpu_custom_call.1
$region0: #{tpu_custom_call.1}
  #allocation0 [shape = 'u32[]', space=smem, size = 0x4, offset = 0x4, fixed_abs, tag = 'smem constant byte address 0x4 - core index']
  #allocation1 [shape = 'u32[144,128]{1,0:T(1,128)}', space=vmem, size = 0x12000, scoped, tag = 'internal scratch']
  %s0 = inlined_call_operand.vmem [shape: f32[2,36,256], index: 0, kind: input, shape index: {}]
  %s1 = inlined_call_operand.vmem [shape: f32[16,36], index: 1, kind: input, shape index: {}]
  %s2 = inlined_call_operand.vmem [shape: f32[16,1], index: 2, kind: input, shape index: {}]
  %s3 = inlined_call_operand.hbm [shape: f32[2,8,256], index: 3, kind: output, shape index: {0}]
  %s4 = inlined_call_operand.vmem [shape: f32[2,8,1], index: 4, kind: output, shape index: {1}]
  %s5 = inlined_call_operand.vmem [shape: f32[2,8,1], index: 5, kind: output, shape index: {2}]
  %6 = xla_tuple %s3, %s4, %s5
  %s7 = sld [smem:[#allocation0]]
  $region103: #{tpu_custom_call.1} parent=0
    _
  %s9 = ssub.s32 1, %s7
  %s10 = scalar_select 0, %s9, %s7
  $region1: #{tpu_custom_call.1} parent=0
    #allocation2 [shape = 'u8[40960]{0}', space=vmem, size = 0xa000, scoped, tag = 'input window, operand 0']
    #allocation3 [shape = 'u8[8192]{0}', space=vmem, size = 0x2000, scoped, tag = 'output window, operand 0']
    #allocation4 [shape = 's32[2]{0}', space=sflag, size = 0x8, scoped, tag = 'scoped memory for tpu_custom_call.1']
    %11 = vsyncpa [#allocation4], 0
    %s12 = scalar_lea.sflag [#allocation4], 1
    %13 = vsyncpa %s12, 0
    loop: start=0, step=1, limit=6
    $region2: #{tpu_custom_call.1} parent=1 // loop_pre_header
      _
    $region3: #{tpu_custom_call.1} parent=1 // loop_header
      %s15 = sphi 0, %s19
      %p16 = scmp.ge.s32.totalorder %s15, 6
      %s22 = sphi 0, %s34
      %s23 = sphi 0, %s30
      %s24 = sphi 0, %s22
      %s25 = sphi 0, %s23
      %s26 = sphi 0, %s24
      %s27 = sphi 0, %s25
      %s39 = sphi 0, %s41
      %s42 = sphi 0, %s39
      %s43 = sphi 0, %s42
      %s59 = sphi 0, %s43
      %s63 = sphi 0, %s63
      %s65 = sphi 0, %s63
      %s66 = sphi 0, %s65
      %s80 = sphi 0, %s66
      %s84 = sphi 0, %s84
      %s86 = sphi 0, %s84
      %s87 = sphi 0, %s86
      %s101 = sphi 0, %s87
      %s109 = sphi 0, %s111
      %s112 = sphi 0, %s109
      %s113 = sphi 0, %s112
      %s129 = sphi 0, %s113
      %s135 = sphi 0, %s137
      %s138 = sphi 0, %s135
      %s139 = sphi 0, %s138
      %s155 = sphi 0, %s139
      %s161 = sphi 0, %s163
      %s164 = sphi 0, %s161
      %s165 = sphi 0, %s164
      %s181 = sphi 0, %s165
    $region4: #{tpu_custom_call.1} parent=1 // loop_header_branch
      %18 = sbr.rel (%p16) target = $region8
    $region5: #{tpu_custom_call.1} parent=1 // loop_body
      %s20 = ssub.s32 %s15, 1
      %s21 = ssub.s32 %s15, 2
      %s28 = sadd.s32 1, %s23
      %p29 = scmp.ge.s32.totalorder %s28, 2
      %s30 = scalar_select %p29, 0, %s28
      %s31 = sadd.s32 1, %s22
      %s32 = scalar_select %p29, %s31, %s22
      %p33 = scmp.ge.s32.totalorder %s32, 2
      %s34 = scalar_select %p33, 0, %s32
      %s35 = ssub.s32 %s22, %s34
      %s36 = ssub.s32 %s23, %s30
      %s37 = sor.u32 %s35, %s36
      %p38 = scmp.eq.s32.totalorder %s37, 0
      %s40 = sadd.s32 %s39, 1
      %s41 = scalar_select %p38, %s39, %s40
      %p44 = pneg %p38
      %p45 = scmp.eq.s32.totalorder %s15, 3
      %p46 = por %p44, %p45
      %p47 = scmp.ne.s32.totalorder %s39, %s42
      %p48 = scmp.eq.s32.totalorder %s15, 0
      %p49 = por %p47, %p48
      %p50 = scmp.ne.s32.totalorder %s39, %s42
      %p51 = scmp.eq.s32.totalorder %s20, 3
      %p52 = por %p50, %p51
      %p53 = scmp.ne.s32.totalorder %s42, %s43
      %p54 = scmp.eq.s32.totalorder %s20, 0
      %p55 = por %p53, %p54
      %p56 = scmp.ne.s32.totalorder %s42, %s43
      %p57 = scmp.eq.s32.totalorder %s21, 3
      %p58 = por %p56, %p57
      %p60 = scmp.ne.s32.totalorder %s43, %s59
      %p61 = scmp.eq.s32.totalorder %s21, 0
      %p62 = por %p60, %p61
      %s64 = sadd.s32 %s63, 1
      %p67 = scmp.eq.s32.totalorder %s15, 3
      %p68 = scmp.ne.s32.totalorder %s63, %s65
      %p69 = scmp.eq.s32.totalorder %s15, 0
      %p70 = por %p68, %p69
      %p71 = scmp.ne.s32.totalorder %s63, %s65
      %p72 = scmp.eq.s32.totalorder %s20, 3
      %p73 = por %p71, %p72
      %p74 = scmp.ne.s32.totalorder %s65, %s66
      %p75 = scmp.eq.s32.totalorder %s20, 0
      %p76 = por %p74, %p75
      %p77 = scmp.ne.s32.totalorder %s65, %s66
      %p78 = scmp.eq.s32.totalorder %s21, 3
      %p79 = por %p77, %p78
      %p81 = scmp.ne.s32.totalorder %s66, %s80
      %p82 = scmp.eq.s32.totalorder %s21, 0
      %p83 = por %p81, %p82
      %s85 = sadd.s32 %s84, 1
      %p88 = scmp.eq.s32.totalorder %s15, 3
      %p89 = scmp.ne.s32.totalorder %s84, %s86
      %p90 = scmp.eq.s32.totalorder %s15, 0
      %p91 = por %p89, %p90
      %p92 = scmp.ne.s32.totalorder %s84, %s86
      %p93 = scmp.eq.s32.totalorder %s20, 3
      %p94 = por %p92, %p93
      %p95 = scmp.ne.s32.totalorder %s86, %s87
      %p96 = scmp.eq.s32.totalorder %s20, 0
      %p97 = por %p95, %p96
      %p98 = scmp.ne.s32.totalorder %s86, %s87
      %p99 = scmp.eq.s32.totalorder %s21, 3
      %p100 = por %p98, %p99
      %p102 = scmp.ne.s32.totalorder %s87, %s101
      %p103 = scmp.eq.s32.totalorder %s21, 0
      %p104 = por %p102, %p103
      %s105 = ssub.s32 %s22, %s34
      %s106 = ssub.s32 %s23, %s30
      %s107 = sor.u32 %s105, %s106
      %p108 = scmp.eq.s32.totalorder %s107, 0
      %s110 = sadd.s32 %s109, 1
      %s111 = scalar_select %p108, %s109, %s110
      %p114 = pneg %p108
      %p115 = scmp.eq.s32.totalorder %s15, 3
      %p116 = por %p114, %p115
      %p117 = scmp.ne.s32.totalorder %s109, %s112
      %p118 = scmp.eq.s32.totalorder %s15, 0
      %p119 = por %p117, %p118
      %p120 = scmp.ne.s32.totalorder %s109, %s112
      %p121 = scmp.eq.s32.totalorder %s20, 3
      %p122 = por %p120, %p121
      %p123 = scmp.ne.s32.totalorder %s112, %s113
      %p124 = scmp.eq.s32.totalorder %s20, 0
      %p125 = por %p123, %p124
      %p126 = scmp.ne.s32.totalorder %s112, %s113
      %p127 = scmp.eq.s32.totalorder %s21, 3
      %p128 = por %p126, %p127
      %p130 = scmp.ne.s32.totalorder %s113, %s129
      %p131 = scmp.eq.s32.totalorder %s21, 0
      %p132 = por %p130, %p131
      %s133 = ssub.s32 %s22, %s34
      %p134 = scmp.eq.s32.totalorder %s133, 0
      %s136 = sadd.s32 %s135, 1
      %s137 = scalar_select %p134, %s135, %s136
      %p140 = pneg %p134
      %p141 = scmp.eq.s32.totalorder %s15, 3
      %p142 = por %p140, %p141
      %p143 = scmp.ne.s32.totalorder %s135, %s138
      %p144 = scmp.eq.s32.totalorder %s15, 0
      %p145 = por %p143, %p144
      %p146 = scmp.ne.s32.totalorder %s135, %s138
      %p147 = scmp.eq.s32.totalorder %s20, 3
      %p148 = por %p146, %p147
      %p149 = scmp.ne.s32.totalorder %s138, %s139
      %p150 = scmp.eq.s32.totalorder %s20, 0
      %p151 = por %p149, %p150
      %p152 = scmp.ne.s32.totalorder %s138, %s139
      %p153 = scmp.eq.s32.totalorder %s21, 3
      %p154 = por %p152, %p153
      %p156 = scmp.ne.s32.totalorder %s139, %s155
      %p157 = scmp.eq.s32.totalorder %s21, 0
      %p158 = por %p156, %p157
      %s159 = ssub.s32 %s22, %s34
      %p160 = scmp.eq.s32.totalorder %s159, 0
      %s162 = sadd.s32 %s161, 1
      %s163 = scalar_select %p160, %s161, %s162
      %p166 = pneg %p160
      %p167 = scmp.eq.s32.totalorder %s15, 3
      %p168 = por %p166, %p167
      %p169 = scmp.ne.s32.totalorder %s161, %s164
      %p170 = scmp.eq.s32.totalorder %s15, 0
      %p171 = por %p169, %p170
      %p172 = scmp.ne.s32.totalorder %s161, %s164
      %p173 = scmp.eq.s32.totalorder %s20, 3
      %p174 = por %p172, %p173
      %p175 = scmp.ne.s32.totalorder %s164, %s165
      %p176 = scmp.eq.s32.totalorder %s20, 0
      %p177 = por %p175, %p176
      %p178 = scmp.ne.s32.totalorder %s164, %s165
      %p179 = scmp.eq.s32.totalorder %s21, 3
      %p180 = por %p178, %p179
      %p182 = scmp.ne.s32.totalorder %s165, %s181
      %p183 = scmp.eq.s32.totalorder %s21, 0
      %p184 = por %p182, %p183
      %p185 = scmp.le.s32.totalorder 1, %s15
      %p186 = scmp.lt.s32.totalorder %s15, 5
      %p187 = pnand %p185, %p186
      %p188 = pneg %p187
      // Predicated region
      $region9: #{tpu_custom_call.1} parent=5 // pred_check
        _
      $region10: #{tpu_custom_call.1} parent=5 // pred_check_branch
        %190 = sbr.rel (%p187) target = $region12
      $region11: #{tpu_custom_call.1} parent=5 // pred_region
        %s191 = ssub.s32 %s15, 1
        // Predicated region
        $region13: #{tpu_custom_call.1} parent=11 // pred_check
          %p192 = pneg %p76
        $region14: #{tpu_custom_call.1} parent=11 // pred_check_branch
          %194 = sbr.rel (%p192) target = $region16
        $region15: #{tpu_custom_call.1} parent=11 // pred_region
          _
        $region16: #{tpu_custom_call.1} parent=11 // pred_fallthru
          _
        // Predicated region
        $region17: #{tpu_custom_call.1} parent=11 // pred_check
          %p195 = pneg %p97
        $region18: #{tpu_custom_call.1} parent=11 // pred_check_branch
          %197 = sbr.rel (%p195) target = $region20
        $region19: #{tpu_custom_call.1} parent=11 // pred_region
          _
        $region20: #{tpu_custom_call.1} parent=11 // pred_fallthru
          _
      $region12: #{tpu_custom_call.1} parent=5 // pred_fallthru
        _
      %p198 = scmp.lt.s32.totalorder %s15, 4
      // Predicated region
      $region21: #{tpu_custom_call.1} parent=5 // pred_check
        %p199 = pneg %p198
      $region22: #{tpu_custom_call.1} parent=5 // pred_check_branch
        %201 = sbr.rel (%p199) target = $region24
      $region23: #{tpu_custom_call.1} parent=5 // pred_region
        // Predicated region
        $region25: #{tpu_custom_call.1} parent=23 // pred_check
          %p202 = pneg %p49
        $region26: #{tpu_custom_call.1} parent=23 // pred_check_branch
          %204 = sbr.rel (%p202) target = $region28
        $region27: #{tpu_custom_call.1} parent=23 // pred_region
          %s205 = sand.u32 %s39, 1
          %s206 = sand.u32 %s39, 1
          %s207 = smul.addr %s206, 40
          %s208 = scalar_lea.vmem [#allocation2], %s207
          %s209 = smul.addr %s22, 10
          %s210 = sadd.s32 %s23, %s209
          %s211 = smul.addr %s210, 8
          %s212 = scalar_lea.vmem %s0, %s211
          // Predicated region
          $region29: #{tpu_custom_call.1} parent=27 // pred_check
            _
          $region30: #{tpu_custom_call.1} parent=27 // pred_check_branch
            %214 = sbr.rel (0) target = $region32
          $region31: #{tpu_custom_call.1} parent=27 // pred_region
            // Predicated region
            $region33: #{tpu_custom_call.1} parent=31 // pred_check
              _
            $region34: #{tpu_custom_call.1} parent=31 // pred_check_branch
              %216 = sbr.rel (0) target = $region36
            $region35: #{tpu_custom_call.1} parent=31 // pred_region
              // Predicated region
              $region48: #{tpu_custom_call.1} parent=35 // pred_check
                _
              $region49: #{tpu_custom_call.1} parent=35 // pred_check_branch
                %240 = sbr.rel (0) target = $region51
              $region50: #{tpu_custom_call.1} parent=35 // pred_region
                loop: start=0, step=1, limit=1
                $region52: #{tpu_custom_call.1} parent=50 // loop_pre_header
                  _
                $region53: #{tpu_custom_call.1} parent=50 // loop_header
                  %s242 = sphi 0, %s246
                  %p243 = scmp.ge.s32.totalorder %s242, 1
                  %s247 = sphi %s212, %s212
                  %s248 = sphi %s208, %s208
                $region54: #{tpu_custom_call.1} parent=50 // loop_header_branch
                  %245 = sbr.rel (%p243) target = $region58
                $region55: #{tpu_custom_call.1} parent=50 // loop_body
                  %v249 = vld [vmem:[%s247] sm:$0xff]
                  %250 = vst [vmem:[%s248] sm:$0xff] %v249
                  %v251 = vld [vmem:[%s247 + $0x10] sm:$0xff]
                  %252 = vst [vmem:[%s248 + $0x8] sm:$0xff] %v251
                  %v253 = vld [vmem:[%s247 + $0x20] sm:$0xff]
                  %254 = vst [vmem:[%s248 + $0x10] sm:$0xff] %v253
                  %v255 = vld [vmem:[%s247 + $0x30] sm:$0xff]
                  %256 = vst [vmem:[%s248 + $0x18] sm:$0xff] %v255
                  %v257 = vld [vmem:[%s247 + $0x40] sm:$0xff]
                  %258 = vst [vmem:[%s248 + $0x20] sm:$0xff] %v257
                $region56: #{tpu_custom_call.1} parent=50 // loop_footer
                  %s246 = sadd.s32 1, %s242
                $region57: #{tpu_custom_call.1} parent=50 // loop_footer_branch
                  %241 = sbr.rel target = $region53
                $region58: #{tpu_custom_call.1} parent=50 // loop_exit
                  _
              $region51: #{tpu_custom_call.1} parent=35 // pred_fallthru
                _
              // Predicated region
              $region59: #{tpu_custom_call.1} parent=35 // pred_check
                _
              $region60: #{tpu_custom_call.1} parent=35 // pred_check_branch
                %260 = sbr.rel target = $region62
              $region61: #{tpu_custom_call.1} parent=35 // pred_region
                _
              $region62: #{tpu_custom_call.1} parent=35 // pred_fallthru
                _
            $region36: #{tpu_custom_call.1} parent=31 // pred_fallthru
              _
            // Predicated region
            $region37: #{tpu_custom_call.1} parent=31 // pred_check
              _
            $region38: #{tpu_custom_call.1} parent=31 // pred_check_branch
              %218 = sbr.rel target = $region40
            $region39: #{tpu_custom_call.1} parent=31 // pred_region
              %s220 = ssub.s32 256, 1
              loop: start=0, step=1, limit=1
              $region41: #{tpu_custom_call.1} parent=39 // loop_pre_header
                _
              $region42: #{tpu_custom_call.1} parent=39 // loop_header
                %s222 = sphi 0, %s226
                %p223 = scmp.ge.s32.totalorder %s222, 1
                %s227 = sphi %s212, %s212
                %s228 = sphi %s208, %s208
              $region43: #{tpu_custom_call.1} parent=39 // loop_header_branch
                %225 = sbr.rel (%p223) target = $region47
              $region44: #{tpu_custom_call.1} parent=39 // loop_body
                %v229 = vld [vmem:[%s227] sm:%s220]
                %230 = vst [vmem:[%s228] sm:%s220] %v229
                %v231 = vld [vmem:[%s227 + $0x10] sm:%s220]
                %232 = vst [vmem:[%s228 + $0x8] sm:%s220] %v231
                %v233 = vld [vmem:[%s227 + $0x20] sm:%s220]
                %234 = vst [vmem:[%s228 + $0x10] sm:%s220] %v233
                %v235 = vld [vmem:[%s227 + $0x30] sm:%s220]
                %236 = vst [vmem:[%s228 + $0x18] sm:%s220] %v235
                %v237 = vld [vmem:[%s227 + $0x40] sm:%s220]
                %238 = vst [vmem:[%s228 + $0x20] sm:%s220] %v237
              $region45: #{tpu_custom_call.1} parent=39 // loop_footer
                %s226 = sadd.s32 1, %s222
              $region46: #{tpu_custom_call.1} parent=39 // loop_footer_branch
                %221 = sbr.rel target = $region42
              $region47: #{tpu_custom_call.1} parent=39 // loop_exit
                _
            $region40: #{tpu_custom_call.1} parent=31 // pred_fallthru
              _
          $region32: #{tpu_custom_call.1} parent=27 // pred_fallthru
            _
          %261 = vnop
        $region28: #{tpu_custom_call.1} parent=23 // pred_fallthru
          _
      $region24: #{tpu_custom_call.1} parent=5 // pred_fallthru
        _
      %p262 = scmp.le.s32.totalorder 1, %s15
      %p263 = scmp.lt.s32.totalorder %s15, 5
      %p264 = pnand %p262, %p263
      %p265 = pneg %p264
      // Predicated region
      $region63: #{tpu_custom_call.1} parent=5 // pred_check
        _
      $region64: #{tpu_custom_call.1} parent=5 // pred_check_branch
        %267 = sbr.rel (%p264) target = $region66
      $region65: #{tpu_custom_call.1} parent=5 // pred_region
        %s268 = ssub.s32 %s15, 1
        %s269 = sand.u32 %s42, 1
        %s270 = sand.u32 %s42, 1
        %s271 = smul.addr %s270, 40
        %s272 = scalar_lea.vmem [#allocation2], %s271
        // Predicated region
        $region67: #{tpu_custom_call.1} parent=65 // pred_check
          %p273 = pneg %p55
        $region68: #{tpu_custom_call.1} parent=65 // pred_check_branch
          %275 = sbr.rel (%p273) target = $region70
        $region69: #{tpu_custom_call.1} parent=65 // pred_region
          _
        $region70: #{tpu_custom_call.1} parent=65 // pred_fallthru
          _
        %s276 = sand.u32 %s42, 1
        %s277 = sand.u32 %s42, 1
        %s278 = smul.addr %s277, 40
        %s279 = scalar_lea.vmem [#allocation2], %s278
        %p280 = pneg %p55
        %p281 = pneg %p52
        %p282 = pneg %p76
        %p283 = pneg %p73
        %p284 = pneg %p97
        %p285 = pneg %p94
        %p286 = pneg %p125
        %p287 = pneg %p122
        %s288 = sand.u32 %s112, 1
        %s289 = scalar_lea.sflag [#allocation4], %s288
        %s290 = sand.u32 %s112, 1
        %s291 = smul.addr %s290, 8
        %s292 = scalar_lea.vmem [#allocation3], %s291
        %p293 = pneg %p151
        %p294 = pneg %p148
        %p295 = scmp.lt.s32.totalorder %s24, 1
        %s296 = scalar_select %p295, %s24, 1
        %s297 = smul.addr %s296, 8
        %s298 = scalar_lea.vmem %s4, %s297
        %p299 = pneg %p177
        %p300 = pneg %p174
        %p301 = scmp.lt.s32.totalorder %s24, 1
        %s302 = scalar_select %p301, %s24, 1
        %s303 = smul.addr %s302, 8
        %s304 = scalar_lea.vmem %s5, %s303
        %p305 = scmp.lt.s32.totalorder %s24, 1
        %s306 = scalar_select %p305, %s24, 1
        %s307 = smul.addr %s306, 8
        %s308 = scalar_lea.vmem %s4, %s307
        %p309 = scmp.lt.s32.totalorder %s24, 1
        %s310 = scalar_select %p309, %s24, 1
        %s311 = smul.addr %s310, 8
        %s312 = scalar_lea.vmem %s5, %s311
        %p313 = scmp.eq.s32.totalorder %s25, 0
        // Predicated region
        $region71: #{tpu_custom_call.1} parent=65 // pred_check
          %p314 = pneg %p313
        $region72: #{tpu_custom_call.1} parent=65 // pred_check_branch
          %316 = sbr.rel (%p314) target = $region74
        $region73: #{tpu_custom_call.1} parent=65 // pred_region
          %vm317 = vcmask 7168
          %318 = vst.msk [vmem:[%s308] sm:$0xff] %vm317, 0.0
          %319 = vst.msk [vmem:[%s312] sm:$0xff] %vm317, 0.0
        $region74: #{tpu_custom_call.1} parent=65 // pred_fallthru
          _
        %v320 = vld [vmem:[%s1] sm:$0xff]
        %v321 = vld [vmem:[%s1 + $0x8] sm:$0xff]
        %v322 = vld [vmem:[%s272] sm:$0xff]
        %v323 = vld [vmem:[%s272 + $0x8] sm:$0xff]
        %v324 = vld [vmem:[%s272 + $0x10] sm:$0xff]
        %v325 = vld [vmem:[%s272 + $0x18] sm:$0xff]
        %v326 = vld [vmem:[%s272 + $0x20] sm:$0xf]
        %v327 = vld [vmem:[%s2] sm:$0xff]
        %v328 = vld [vmem:[%s2 + $0x8] sm:$0xff]
        %330 = vset.pattern.permute.xlu0 0
        %331 = vperm.xlu0 %330, %v327
        %v332 = vpop.permute.xlu0 %331
        %335 = vset.pattern.permute.xlu0 0
        %336 = vperm.xlu0 %335, %v328
        %v337 = vpop.permute.xlu0 %336
        %vm339 = vcmask 293888
        %v341 = vsel %vm339, %v320, 0
        %v344 = vsel %vm339, %v321, 0
        %vm346 = vcmask 1043456
        %v348 = vsel %vm346, %v326, 0
        %350 = vmatprep.subr.mxu0 0.0
        %351 = vmatpush1.msra.mxu0 0.0
        %352 = vmatprep.subr.mxu0 0.0
        %353 = vmatpush1.msra.mxu0 0.0
        %354 = vmatprep.subr.mxu0 0.0
        %355 = vmatpush1.msra.mxu0 0.0
        %356 = vmatprep.subr.mxu0 0.0
        %357 = vmatpush1.msra.mxu0 0.0
        %358 = vmatprep.subr.mxu0 0.0
        %359 = vmatpush1.msra.mxu0 0.0
        %360 = vmatprep.subr.mxu0 0.0
        %361 = vmatpush1.msra.mxu0 0.0
        %362 = vmatprep.subr.mxu0 0.0
        %363 = vmatpush1.msra.mxu0 0.0
        %364 = vmatprep.subr.mxu0 0.0
        %365 = vmatpush1.msra.mxu0 0.0
        %366 = vmatprep.subr.mxu0 0.0
        %367 = vmatpush1.msra.mxu0 0.0
        %368 = vmatprep.subr.mxu0 0.0
        %369 = vmatpush1.msra.mxu0 0.0
        %370 = vmatprep.subr.mxu0 0.0
        %371 = vmatpush1.msra.mxu0 0.0
        %372 = vmatprep.subr.mxu0 0.0
        %373 = vmatpush1.msra.mxu0 %v348
        %374 = vmatprep.subr.mxu0 0.0
        %375 = vmatpush1.msra.mxu0 %v325
        %376 = vmatprep.subr.mxu0 0.0
        %377 = vmatpush1.msra.mxu0 %v324
        %378 = vmatprep.subr.mxu0 0.0
        %379 = vmatpush1.msra.mxu0 %v323
        %380 = vmatprep.subr.mxu0 0.0
        %381 = vmatpush1.msra.mxu0 %v322
        %382 = vmatprep.subr.mxu0 0.0
        %383 = vmatpush2.msra.mxu0 0.0
        %384 = vmatprep.subr.mxu0 0.0
        %385 = vmatpush2.msra.mxu0 0.0
        %386 = vmatprep.subr.mxu0 0.0
        %387 = vmatpush2.msra.mxu0 0.0
        %388 = vmatprep.subr.mxu0 0.0
        %389 = vmatpush2.msra.mxu0 0.0
        %390 = vmatprep.subr.mxu0 0.0
        %391 = vmatpush2.msra.mxu0 0.0
        %392 = vmatprep.subr.mxu0 0.0
        %393 = vmatpush2.msra.mxu0 0.0
        %394 = vmatprep.subr.mxu0 0.0
        %395 = vmatpush2.msra.mxu0 0.0
        %396 = vmatprep.subr.mxu0 0.0
        %397 = vmatpush2.msra.mxu0 0.0
        %398 = vmatprep.subr.mxu0 0.0
        %399 = vmatpush2.msra.mxu0 0.0
        %400 = vmatprep.subr.mxu0 0.0
        %401 = vmatpush2.msra.mxu0 0.0
        %402 = vmatprep.subr.mxu0 0.0
        %403 = vmatpush2.msra.mxu0 0.0
        %404 = vmatprep.subr.mxu0 0.0
        %405 = vmatpush2.msra.mxu0 0.0
        %406 = vmatprep.subr.mxu0 0.0
        %407 = vmatpush2.msra.mxu0 0.0
        %408 = vmatprep.subr.mxu0 0.0
        %409 = vmatpush2.msra.mxu0 0.0
        %410 = vmatprep.subr.mxu0 0.0
        %411 = vmatpush2.msra.mxu0 0.0
        %412 = vmatprep.subr.mxu0 0.0
        %413 = vmatpush2.msra.mxu0 0.0
        %414 = vmatprep.mubr.f32.mxu0 0.0
        %415 = vmatmul.mubr.f32.gmra.mxu0 %v341
        %v416 = vpop.f32.mrf.mxu0
        %v417 = vadd.f32 %v332, %v416
        %v418 = vpop.f32.mrf.mxu0
        %419 = vmatprep.mubr.f32.mxu0 0.0
        %420 = vmatmul.mubr.f32.gmra.mxu0 %v344
        %v421 = vpop.f32.mrf.mxu0
        %v422 = vadd.f32 %v337, %v421
        %v423 = vpop.f32.mrf.mxu0
        %424 = vdwg.mxu0
        %vm425 = vcmp.ge.f32.partialorder %v417, 0.0
        %v426 = vmul.f32 %v417, 0.2
        %v427 = vsel %vm425, %v417, %v426
        %v428 = vmax.f32 %v422, -60.0
        %v429 = vsub.f32 0.0, %v428
        %v430 = vmul.f32 %v429, 1.442695
        %v431 = vpow.pop %v430
        %v432 = vadd.f32 %v431, 1.0
        %v433 = vrcp.pop %v432
        %v434 = vmul.f32 1.0, %v433
        %v435 = vmul.f32 %v427, %v434
        %436 = vst [vmem:[%s292] sm:$0xff] %v435
        %v437 = vld [vmem:[%s308] sm:$0xff]
        %438 = vadd.xlane.f32.xlu0 %v435
        %v439 = vpop.xlane.xlu0 %438
        %v440 = vadd.f32 %v437, %v439
        %vm441 = vcmask 7168
        %442 = vst.msk [vmem:[%s308] sm:$0xff] %vm441, %v440
        %v443 = vld [vmem:[%s312] sm:$0xff]
        %v444 = vmul.f32 %v435, %v435
        %445 = vadd.xlane.f32.xlu0 %v444
        %v446 = vpop.xlane.xlu0 %445
        %v447 = vadd.f32 %v443, %v446
        %448 = vst.msk [vmem:[%s312] sm:$0xff] %vm441, %v447
        %s449 = sand.u32 %s112, 1
        %s450 = scalar_lea.sflag [#allocation4], %s449
        %s451 = sand.u32 %s112, 1
        %s452 = smul.addr %s451, 8
        %s453 = scalar_lea.vmem [#allocation3], %s452
        %p454 = scmp.lt.s32.totalorder %s24, 1
        %s455 = scalar_select %p454, %s24, 1
        %s456 = smul.addr %s455, 8
        %s457 = scalar_lea.vmem %s4, %s456
        %p458 = scmp.lt.s32.totalorder %s24, 1
        %s459 = scalar_select %p458, %s24, 1
        %s460 = smul.addr %s459, 8
        %s461 = scalar_lea.vmem %s5, %s460
        // Predicated region
        $region75: #{tpu_custom_call.1} parent=65 // pred_check
          %p462 = pneg %p122
        $region76: #{tpu_custom_call.1} parent=65 // pred_check_branch
          %464 = sbr.rel (%p462) target = $region78
        $region77: #{tpu_custom_call.1} parent=65 // pred_region
          %s466 = ssub.s32 128, 128
          %467 = vsyncadd %s450, %s466
          %s468 = smul.addr %s24, 2
          %s469 = sadd.s32 %s25, %s468
          %s470 = smul.addr %s469, 128
          %s471 = scalar_lea.hbm %s3, %s470
          %s473 = sshll.u32 %s453, 4
          %s474 = int_to_ptr.vmem [resolvable:$true] %s473
          %476 = dma.vmem_to_hbm [thread:$0]  %s474, 128, %s471, %s450
        $region78: #{tpu_custom_call.1} parent=65 // pred_fallthru
          _
        // Predicated region
        $region79: #{tpu_custom_call.1} parent=65 // pred_check
          %p477 = pneg %p148
        $region80: #{tpu_custom_call.1} parent=65 // pred_check_branch
          %479 = sbr.rel (%p477) target = $region82
        $region81: #{tpu_custom_call.1} parent=65 // pred_region
          _
        $region82: #{tpu_custom_call.1} parent=65 // pred_fallthru
          _
        // Predicated region
        $region83: #{tpu_custom_call.1} parent=65 // pred_check
          %p480 = pneg %p174
        $region84: #{tpu_custom_call.1} parent=65 // pred_check_branch
          %482 = sbr.rel (%p480) target = $region86
        $region85: #{tpu_custom_call.1} parent=65 // pred_region
          _
        $region86: #{tpu_custom_call.1} parent=65 // pred_fallthru
          _
      $region66: #{tpu_custom_call.1} parent=5 // pred_fallthru
        _
      %p483 = scmp.le.s32.totalorder 2, %s15
      // Predicated region
      $region87: #{tpu_custom_call.1} parent=5 // pred_check
        %p484 = pneg %p483
      $region88: #{tpu_custom_call.1} parent=5 // pred_check_branch
        %486 = sbr.rel (%p484) target = $region90
      $region89: #{tpu_custom_call.1} parent=5 // pred_region
        %s487 = ssub.s32 %s15, 2
        // Predicated region
        $region91: #{tpu_custom_call.1} parent=89 // pred_check
          %p488 = pneg %p128
        $region92: #{tpu_custom_call.1} parent=89 // pred_check_branch
          %490 = sbr.rel (%p488) target = $region94
        $region93: #{tpu_custom_call.1} parent=89 // pred_region
          %s491 = sand.u32 %s113, 1
          %s492 = scalar_lea.sflag [#allocation4], %s491
          %s493 = sand.u32 %s113, 1
          %s494 = smul.addr %s493, 8
          %s495 = scalar_lea.vmem [#allocation3], %s494
          %496 = dma.done %s492, 128
        $region94: #{tpu_custom_call.1} parent=89 // pred_fallthru
          _
        // Predicated region
        $region95: #{tpu_custom_call.1} parent=89 // pred_check
          %p497 = pneg %p154
        $region96: #{tpu_custom_call.1} parent=89 // pred_check_branch
          %499 = sbr.rel (%p497) target = $region98
        $region97: #{tpu_custom_call.1} parent=89 // pred_region
          %p500 = scmp.lt.s32.totalorder %s26, 1
          %s501 = scalar_select %p500, %s26, 1
          %s502 = smul.addr %s501, 8
          %s503 = scalar_lea.vmem %s4, %s502
        $region98: #{tpu_custom_call.1} parent=89 // pred_fallthru
          _
        // Predicated region
        $region99: #{tpu_custom_call.1} parent=89 // pred_check
          %p504 = pneg %p180
        $region100: #{tpu_custom_call.1} parent=89 // pred_check_branch
          %506 = sbr.rel (%p504) target = $region102
        $region101: #{tpu_custom_call.1} parent=89 // pred_region
          %p507 = scmp.lt.s32.totalorder %s26, 1
          %s508 = scalar_select %p507, %s26, 1
          %s509 = smul.addr %s508, 8
          %s510 = scalar_lea.vmem %s5, %s509
        $region102: #{tpu_custom_call.1} parent=89 // pred_fallthru
          _
      $region90: #{tpu_custom_call.1} parent=5 // pred_fallthru
        _
    $region6: #{tpu_custom_call.1} parent=1 // loop_footer
      %s19 = sadd.s32 1, %s15
    $region7: #{tpu_custom_call.1} parent=1 // loop_footer_branch
      %14 = sbr.rel target = $region3
    $region8: #{tpu_custom_call.1} parent=1 // loop_exit
      _
    %511 = vsyncpa [#allocation4], 1
    %s512 = scalar_lea.sflag [#allocation4], 1
    %513 = vsyncpa %s512, 1

</llo_original>
